<compile_context>
chip_gen: v5e
topology: v5e:2x2
jax: 0.10.0
libtpu: 0.0.40
codegen_flags: <defaults>
</compile_context>

<pallas_src>
import math

import jax
import jax.numpy as jnp
from jax import lax
from jax.experimental import pallas as pl
from jax.experimental.pallas import tpu as pltpu

LANE = 128
SUBLANE = 8
IMG_TILE_TARGET_ROWS = 4096   # 2 MiB per f32 buffer; 2 streams x 2 bufs = ~8 MiB
LAT_TILE_TARGET_ROWS = 2048   # 1 MiB per f32 buffer; 4 streams x 2 bufs = ~8 MiB
VMEM_LIMIT_BYTES = 32 * 1024 * 1024  # explicit: >= v5e's 16 MiB scoped default, <= every chip's physical


def _cdiv(a, b):
    return -(-a // b)


def _round_up(a, b):
    return _cdiv(a, b) * b


def _tensorcores_per_chip():
    """1 on v5e/v6e (single TensorCore), 2 on v7x-like devices (megacore split)."""
    try:
        dev = jax.devices()[0]
        if dev.platform != "tpu":
            return 1
        kind = str(getattr(dev, "device_kind", "")).lower()
        if ("v7" in kind) or ("tpu7" in kind) or ("7x" in kind):
            return 2
    except Exception:
        pass
    return 1


def _as_lane_rows(x):
    """Return a lane-dense (rows, 128) view of x in its ORIGINAL dtype.

    Pure reshape (no HBM copy) when x.size % 128 == 0 — true for real Trainer shapes.
    """
    n = x.size
    if n % LANE == 0:
        return x.reshape(n // LANE, LANE), False
    # TODO(synk): lane-ragged fallback pads once (one HBM copy); real Trainer frame/latent
    # element counts are multiples of 128, so this path is never taken in practice.
    rows = _cdiv(n, LANE)
    flat = jnp.pad(x.reshape(-1), (0, rows * LANE - n))
    return flat.reshape(rows, LANE), True


def _plan_tiling(rows, target_rows, max_cores):
    """Pick (cores, inner, tile, tiles) with tile a multiple of 8 that never exceeds `rows`."""
    if rows <= SUBLANE:
        return 1, 1, rows, 1                      # one full-array block
    tiles_guess = max(1, _cdiv(rows, target_rows))
    tile = _round_up(_cdiv(rows, tiles_guess), SUBLANE)
    tile = min(tile, (rows // SUBLANE) * SUBLANE)  # keep block rows <= array rows
    tiles = _cdiv(rows, tile)
    cores = max(1, min(max_cores, tiles))
    inner = _cdiv(tiles, cores)
    return cores, inner, tile, tiles


def _accumulate(acc_ref, vals, tile):
    """Sum (tile,128) f32 into the resident (8,128) accumulator using pure VPU vreg adds."""
    if tile % SUBLANE == 0:
        acc_ref[...] += jnp.sum(vals.reshape(tile // SUBLANE, SUBLANE, LANE), axis=0)
    else:  # tiny full-array block (< 8 rows)
        acc_ref[0:1, :] += jnp.sum(vals, axis=0, keepdims=True)


def _make_mse_kernel(tile, rows, inner, needs_mask):
    def kernel(pred_ref, tgt_ref, sse_ref, acc_ref):
        c = pl.program_id(0)
        i = pl.program_id(1)

        @pl.when(i == 0)
        def _init():
            acc_ref[...] = jnp.zeros_like(acc_ref)

        p = pred_ref[...].astype(jnp.float32)
        t = tgt_ref[...].astype(jnp.float32)
        d = p - t
        sq = d * d
        if needs_mask:
            # UNclamped global tile id: rows past the true end (ragged last tile, and any
            # clamped duplicate grid steps) get masked to exactly 0.
            tid = c * inner + i
            row0 = tid * tile
            valid = (row0 + lax.broadcasted_iota(jnp.int32, (tile, LANE), 0)) < rows
            sq = jnp.where(valid, sq, 0.0)
        _accumulate(acc_ref, sq, tile)

        @pl.when(i == inner - 1)
        def _finalize():
            # in-kernel cross-lane reduce (XLU is free here); one scalar per core, splat into
            # a single lane-dense (1,8,128) block so the wrapper only sums `cores` values.
            sse_ref[...] = jnp.broadcast_to(jnp.sum(acc_ref[...]), (1, SUBLANE, LANE))

    return kernel


def _make_latent_kernel(tile, rows, inner, needs_mask):
    def kernel(mu_ref, lv_ref, eps_ref, z_ref, kl_ref, acc_ref):
        c = pl.program_id(0)
        i = pl.program_id(1)

        @pl.when(i == 0)
        def _init():
            acc_ref[...] = jnp.zeros_like(acc_ref)

        mu = mu_ref[...].astype(jnp.float32)
        lv = lv_ref[...].astype(jnp.float32)
        eps = eps_ref[...].astype(jnp.float32)

        std = jnp.exp(0.5 * lv)        # single transcendental per element
        var = std * std                # reused by the KL term (avoids a second exp)
        z_ref[...] = (mu + std * eps).astype(z_ref.dtype)  # OOB rows of the last tile are dropped

        kl_term = 1.0 + lv - mu * mu - var
        if needs_mask:
            tid = c * inner + i
            row0 = tid * tile
            valid = (row0 + lax.broadcasted_iota(jnp.int32, (tile, LANE), 0)) < rows
            kl_term = jnp.where(valid, kl_term, 0.0)
        _accumulate(acc_ref, kl_term, tile)

        @pl.when(i == inner - 1)
        def _finalize():
            kl_ref[...] = jnp.broadcast_to(jnp.sum(acc_ref[...]), (1, SUBLANE, LANE))

    return kernel


def vae_step_pallas(pred, target, mu, logvar, eps, beta, batch_size):
    """One Trainer step's loss math + latent sampling.

    Returns (z [same shape/dtype as mu], loss, mse, kl, psnr); scalars are float32.
    """
    assert pred.shape == target.shape
    assert mu.shape == logvar.shape == eps.shape
    n_pix = pred.size
    n_lat = mu.size
    cores_hw = _tensorcores_per_chip()

    # -------------------- image path: reconstruction SSE --------------------
    pred2d, _ = _as_lane_rows(pred)
    tgt2d, _ = _as_lane_rows(target)
    img_rows = pred2d.shape[0]
    c_img, inner_img, tile_img, tiles_img = _plan_tiling(img_rows, IMG_TILE_TARGET_ROWS, cores_hw)
    mask_img = (tiles_img * tile_img != img_rows) or (c_img * inner_img != tiles_img)

    if c_img * inner_img == tiles_img:
        img_map = lambda c, i: (c * inner_img + i, 0)
    else:
        # Trailing grid steps of the last core re-read the last real tile (their contribution is
        # fully masked in-kernel), so no block request ever starts past the end of the array.
        img_map = lambda c, i: (jnp.minimum(c * inner_img + i, tiles_img - 1), 0)

    sse_part = pl.pallas_call(
        _make_mse_kernel(tile_img, img_rows, inner_img, mask_img),
        out_shape=jax.ShapeDtypeStruct((c_img, SUBLANE, LANE), jnp.float32),
        grid=(c_img, inner_img),
        in_specs=[
            pl.BlockSpec((tile_img, LANE), img_map),   # pred
            pl.BlockSpec((tile_img, LANE), img_map),   # target
        ],
        out_specs=pl.BlockSpec((1, SUBLANE, LANE), lambda c, i: (c, 0, 0)),
        scratch_shapes=[pltpu.VMEM((SUBLANE, LANE), jnp.float32)],
        compiler_params=pltpu.CompilerParams(
            dimension_semantics=("parallel", "arbitrary"),
            vmem_limit_bytes=VMEM_LIMIT_BYTES),
        cost_estimate=pl.CostEstimate(
            flops=3 * n_pix, transcendentals=0,
            bytes_accessed=2 * n_pix * pred.dtype.itemsize
                           + c_img * SUBLANE * LANE * 4),
    )(pred2d, tgt2d)

    # -------------------- latent path: z sampling + KL --------------------
    mu2d, lat_padded = _as_lane_rows(mu)
    lv2d, _ = _as_lane_rows(logvar)
    eps2d, _ = _as_lane_rows(eps)
    lat_rows = mu2d.shape[0]
    c_lat, inner_lat, tile_lat, tiles_lat = _plan_tiling(lat_rows, LAT_TILE_TARGET_ROWS, cores_hw)
    mask_lat = (tiles_lat * tile_lat != lat_rows) or (c_lat * inner_lat != tiles_lat)

    if c_lat * inner_lat == tiles_lat:
        lat_map = lambda c, i: (c * inner_lat + i, 0)
    else:
        lat_map = lambda c, i: (jnp.minimum(c * inner_lat + i, tiles_lat - 1), 0)

    z2d, kl_part = pl.pallas_call(
        _make_latent_kernel(tile_lat, lat_rows, inner_lat, mask_lat),
        out_shape=(
            jax.ShapeDtypeStruct((lat_rows, LANE), mu.dtype),                # z (exact, no pad)
            jax.ShapeDtypeStruct((c_lat, SUBLANE, LANE), jnp.float32),       # per-core KL scalar
        ),
        grid=(c_lat, inner_lat),
        in_specs=[
            pl.BlockSpec((tile_lat, LANE), lat_map),   # mu
            pl.BlockSpec((tile_lat, LANE), lat_map),   # logvar
            pl.BlockSpec((tile_lat, LANE), lat_map),   # eps
        ],
        out_specs=(
            pl.BlockSpec((tile_lat, LANE), lat_map),
            pl.BlockSpec((1, SUBLANE, LANE), lambda c, i: (c, 0, 0)),
        ),
        scratch_shapes=[pltpu.VMEM((SUBLANE, LANE), jnp.float32)],
        compiler_params=pltpu.CompilerParams(
            dimension_semantics=("parallel", "arbitrary"),
            vmem_limit_bytes=VMEM_LIMIT_BYTES),
        cost_estimate=pl.CostEstimate(
            flops=9 * n_lat, transcendentals=n_lat,
            bytes_accessed=4 * n_lat * mu.dtype.itemsize
                           + c_lat * SUBLANE * LANE * 4),
    )(mu2d, lv2d, eps2d)

    # -------------------- tiny scalar epilogue --------------------
    sse = jnp.sum(sse_part[:, 0, 0])          # sum of `c_img` per-core scalars
    kl_sum = jnp.sum(kl_part[:, 0, 0])        # sum of `c_lat` per-core scalars
    mse = sse / jnp.float32(n_pix)
    kld = -0.5 * kl_sum / jnp.asarray(batch_size, jnp.float32)
    # NOTE: like the reference Generate_PSNR, this is -inf if mse == 0 (identical frames).
    psnr = 20.0 * math.log10(1.0) - 10.0 * (jnp.log(mse) / math.log(10.0))
    beta_c = jnp.minimum(jnp.asarray(beta, jnp.float32), 1.0)
    loss = mse + beta_c * kld

    if lat_padded:
        z = z2d.reshape(-1)[:n_lat].reshape(mu.shape)
    else:
        z = z2d.reshape(mu.shape)   # pure view
    return z, loss, mse, kld, psnr


def _reference(pred, target, mu, logvar, eps, beta, batch_size):
    pred = pred.astype(jnp.float32)
    target = target.astype(jnp.float32)
    mse = jnp.mean((pred - target) ** 2)
    kld = -0.5 * jnp.sum(1.0 + logvar - mu ** 2 - jnp.exp(logvar)) / batch_size
    psnr = 20.0 * math.log10(1.0) - 10.0 * (jnp.log(mse) / jnp.log(10.0))
    z = mu + jnp.exp(0.5 * logvar) * eps
    loss = mse + jnp.minimum(jnp.float32(beta), 1.0) * kld
    return z, loss, mse, kld, psnr


if __name__ == "__main__":
    # Small shapes consistent with the Trainer's per-frame step:
    #   frames:  [B, 3, H, W]      (Generator output "out" / target frame img[i])
    #   latents: [B, N_dim, H, W]  (Gaussian_Predictor mu / logvar / eps)
    B, C, H, W = 2, 3, 16, 16
    N_dim = 4
    batch_size = B
    beta = 0.7  # kl_annealing.get_beta() for some epoch

    key = jax.random.PRNGKey(0)
    k1, k2, k3, k4, k5 = jax.random.split(key, 5)
    pred = jax.random.uniform(k1, (B, C, H, W), jnp.float32)
    target = jax.random.uniform(k2, (B, C, H, W), jnp.float32)
    mu = jax.random.normal(k3, (B, N_dim, H, W), jnp.float32) * 0.5
    logvar = jax.random.normal(k4, (B, N_dim, H, W), jnp.float32) * 0.2
    eps = jax.random.normal(k5, (B, N_dim, H, W), jnp.float32)

    step = jax.jit(vae_step_pallas)
    z, loss, mse, kl, psnr = step(pred, target, mu, logvar, eps, beta, batch_size)
    jax.block_until_ready((z, loss, mse, kl, psnr))

    z_r, loss_r, mse_r, kl_r, psnr_r = _reference(pred, target, mu, logvar, eps,
                                                  beta, batch_size)

    assert jnp.allclose(z, z_r, atol=1e-5, rtol=1e-5), "z mismatch"
    assert jnp.allclose(loss, loss_r, atol=1e-4, rtol=1e-4), "loss mismatch"
    assert jnp.allclose(mse, mse_r, atol=1e-5, rtol=1e-5), "mse mismatch"
    assert jnp.allclose(kl, kl_r, atol=1e-4, rtol=1e-4), "kl mismatch"
    assert jnp.allclose(psnr, psnr_r, atol=1e-3, rtol=1e-4), "psnr mismatch"

    print("KERNEL_OK")
</pallas_src>

<mosaic_0001>
module attributes {stable_mosaic.version = 11 : i64} {
  func.func @kernel(%arg0: i32, %arg1: i32, %arg2: memref<8x128xf32, #tpu.memory_space<vmem>>, %arg3: memref<8x128xf32, #tpu.memory_space<vmem>>, %arg4: memref<1x8x128xf32, #tpu.memory_space<vmem>>, %arg5: memref<8x128xf32, #tpu.memory_space<vmem>>) attributes {dimension_semantics = [#tpu.dimension_semantics<parallel>, #tpu.dimension_semantics<arbitrary>], iteration_bounds = array<i64: 1, 2>, scalar_prefetch = 0 : i64, scratch_operands = 1 : i64, tpu.core_type = #tpu.core_type<tc>, window_params = [{transform_indices = @transform_0, window_bounds = array<i64: 8, 128>}, {transform_indices = @transform_1, window_bounds = array<i64: 8, 128>}, {transform_indices = @transform_2, window_bounds = array<i64: 1, 8, 128>}]} {
    %c0_i32 = arith.constant 0 : i32
    %0 = arith.cmpi eq, %arg1, %c0_i32 : i32
    %1 = arith.extui %0 : i1 to i32
    %c0_i32_0 = arith.constant 0 : i32
    %2 = arith.cmpi ne, %1, %c0_i32_0 : i32
    scf.if %2 {
      %cst_10 = arith.constant 0.000000e+00 : f32
      %25 = vector.broadcast %cst_10 : f32 to vector<8x128xf32>
      %c0_11 = arith.constant 0 : index
      %c0_12 = arith.constant 0 : index
      %26 = vector.load %arg5[%c0_11, %c0_12] : memref<8x128xf32, #tpu.memory_space<vmem>>, vector<8x128xf32>
      tpu.vector_store %arg5[%c0_11, %c0_12], %25 {strides = array<i32>} : memref<8x128xf32, #tpu.memory_space<vmem>>, vector<8x128xf32>,
    } else {
    }
    %c0 = arith.constant 0 : index
    %c0_1 = arith.constant 0 : index
    %3 = vector.load %arg2[%c0, %c0_1] : memref<8x128xf32, #tpu.memory_space<vmem>>, vector<8x128xf32>
    %c0_2 = arith.constant 0 : index
    %c0_3 = arith.constant 0 : index
    %4 = vector.load %arg3[%c0_2, %c0_3] : memref<8x128xf32, #tpu.memory_space<vmem>>, vector<8x128xf32>
    %5 = arith.subf %3, %4 : vector<8x128xf32>
    %6 = arith.mulf %5, %5 : vector<8x128xf32>
    %c2_i32 = arith.constant 2 : i32
    %7 = arith.muli %arg0, %c2_i32 : i32
    %8 = arith.addi %7, %arg1 : i32
    %c8_i32 = arith.constant 8 : i32
    %9 = arith.muli %8, %c8_i32 : i32
    %10 = tpu.iota {dimensions = array<i32: 0>} : vector<8x128xi32>
    %11 = vector.broadcast %9 : i32 to vector<8x128xi32>
    %12 = arith.addi %11, %10 : vector<8x128xi32>
    %c12_i32 = arith.constant 12 : i32
    %13 = vector.broadcast %c12_i32 : i32 to vector<8x128xi32>
    %14 = arith.cmpi slt, %12, %13 : vector<8x128xi32>
    %cst = arith.constant 0.000000e+00 : f32
    %15 = vector.broadcast %cst : f32 to vector<8x128xf32>
    %16 = arith.select %14, %6, %15 : vector<8x128xi1>, vector<8x128xf32>
    %c0_4 = arith.constant 0 : index
    %c0_5 = arith.constant 0 : index
    %17 = vector.load %arg5[%c0_4, %c0_5] : memref<8x128xf32, #tpu.memory_space<vmem>>, vector<8x128xf32>
    %18 = vector.shape_cast %16 : vector<8x128xf32> to vector<1x8x128xf32>
    %cst_6 = arith.constant dense<0.000000e+00> : vector<8x128xf32>
    %19 = vector.multi_reduction <add>, %18, %cst_6 [0] : vector<1x8x128xf32> to vector<8x128xf32>
    %20 = arith.addf %17, %19 : vector<8x128xf32>
    %c0_7 = arith.constant 0 : index
    %c0_8 = arith.constant 0 : index
    %21 = vector.load %arg5[%c0_7, %c0_8] : memref<8x128xf32, #tpu.memory_space<vmem>>, vector<8x128xf32>
    tpu.vector_store %arg5[%c0_7, %c0_8], %20 {strides = array<i32>} : memref<8x128xf32, #tpu.memory_space<vmem>>, vector<8x128xf32>,
    %c1_i32 = arith.constant 1 : i32
    %22 = arith.cmpi eq, %arg1, %c1_i32 : i32
    %23 = arith.extui %22 : i1 to i32
    %c0_i32_9 = arith.constant 0 : i32
    %24 = arith.cmpi ne, %23, %c0_i32_9 : i32
    scf.if %24 {
      %c0_10 = arith.constant 0 : index
      %c0_11 = arith.constant 0 : index
      %25 = vector.load %arg5[%c0_10, %c0_11] : memref<8x128xf32, #tpu.memory_space<vmem>>, vector<8x128xf32>
      %26 = vector.shape_cast %25 : vector<8x128xf32> to vector<1x8x128xf32>
      %cst_12 = arith.constant dense<0.000000e+00> : vector<1xf32>
      %27 = vector.multi_reduction <add>, %26, %cst_12 [1, 2] : vector<1x8x128xf32> to vector<1xf32>
      %28 = vector.shape_cast %27 : vector<1xf32> to vector<1x1x1xf32>
      %29 = vector.extract %28[0, 0, 0] : f32 from vector<1x1x1xf32>
      %30 = vector.broadcast %29 : f32 to vector<1x8x128xf32>
      %c0_13 = arith.constant 0 : index
      %c0_14 = arith.constant 0 : index
      %c0_15 = arith.constant 0 : index
      %31 = vector.load %arg4[%c0_13, %c0_14, %c0_15] : memref<1x8x128xf32, #tpu.memory_space<vmem>>, vector<1x8x128xf32>
      tpu.vector_store %arg4[%c0_13, %c0_14, %c0_15], %30 {strides = array<i32>} : memref<1x8x128xf32, #tpu.memory_space<vmem>>, vector<1x8x128xf32>,
    } else {
    }
    return
  }
  func.func @transform_0(%arg0: i32, %arg1: i32) -> (i32, i32) {
    %c2_i32 = arith.constant 2 : i32
    %0 = arith.muli %arg0, %c2_i32 : i32
    %1 = arith.addi %0, %arg1 : i32
    %c0_i32 = arith.constant 0 : i32
    %c0_i32_0 = arith.constant 0 : i32
    return %1, %c0_i32 : i32, i32
  }
  func.func @transform_1(%arg0: i32, %arg1: i32) -> (i32, i32) {
    %c2_i32 = arith.constant 2 : i32
    %0 = arith.muli %arg0, %c2_i32 : i32
    %1 = arith.addi %0, %arg1 : i32
    %c0_i32 = arith.constant 0 : i32
    %c0_i32_0 = arith.constant 0 : i32
    return %1, %c0_i32 : i32, i32
  }
  func.func @transform_2(%arg0: i32, %arg1: i32) -> (i32, i32, i32) {
    %c0_i32 = arith.constant 0 : i32
    %c0_i32_0 = arith.constant 0 : i32
    %c0_i32_1 = arith.constant 0 : i32
    return %arg0, %c0_i32, %c0_i32_0 : i32, i32, i32
  }
}

module attributes {stable_mosaic.version = 11 : i64} {
  func.func @kernel(%arg0: i32, %arg1: i32, %arg2: memref<16x128xf32, #tpu.memory_space<vmem>>, %arg3: memref<16x128xf32, #tpu.memory_space<vmem>>, %arg4: memref<16x128xf32, #tpu.memory_space<vmem>>, %arg5: memref<16x128xf32, #tpu.memory_space<vmem>>, %arg6: memref<1x8x128xf32, #tpu.memory_space<vmem>>, %arg7: memref<8x128xf32, #tpu.memory_space<vmem>>) attributes {dimension_semantics = [#tpu.dimension_semantics<parallel>, #tpu.dimension_semantics<arbitrary>], iteration_bounds = array<i64: 1, 1>, scalar_prefetch = 0 : i64, scratch_operands = 1 : i64, tpu.core_type = #tpu.core_type<tc>, window_params = [{transform_indices = @transform_0, window_bounds = array<i64: 16, 128>}, {transform_indices = @transform_1, window_bounds = array<i64: 16, 128>}, {transform_indices = @transform_2, window_bounds = array<i64: 16, 128>}, {transform_indices = @transform_3, window_bounds = array<i64: 16, 128>}, {transform_indices = @transform_4, window_bounds = array<i64: 1, 8, 128>}]} {
    %c0_i32 = arith.constant 0 : i32
    %0 = arith.cmpi eq, %arg1, %c0_i32 : i32
    %1 = arith.extui %0 : i1 to i32
    %c0_i32_0 = arith.constant 0 : i32
    %2 = arith.cmpi ne, %1, %c0_i32_0 : i32
    scf.if %2 {
      %cst_16 = arith.constant 0.000000e+00 : f32
      %26 = vector.broadcast %cst_16 : f32 to vector<8x128xf32>
      %c0_17 = arith.constant 0 : index
      %c0_18 = arith.constant 0 : index
      %27 = vector.load %arg7[%c0_17, %c0_18] : memref<8x128xf32, #tpu.memory_space<vmem>>, vector<8x128xf32>
      tpu.vector_store %arg7[%c0_17, %c0_18], %26 {strides = array<i32>} : memref<8x128xf32, #tpu.memory_space<vmem>>, vector<8x128xf32>,
    } else {
    }
    %c0 = arith.constant 0 : index
    %c0_1 = arith.constant 0 : index
    %3 = vector.load %arg2[%c0, %c0_1] : memref<16x128xf32, #tpu.memory_space<vmem>>, vector<16x128xf32>
    %c0_2 = arith.constant 0 : index
    %c0_3 = arith.constant 0 : index
    %4 = vector.load %arg3[%c0_2, %c0_3] : memref<16x128xf32, #tpu.memory_space<vmem>>, vector<16x128xf32>
    %c0_4 = arith.constant 0 : index
    %c0_5 = arith.constant 0 : index
    %5 = vector.load %arg4[%c0_4, %c0_5] : memref<16x128xf32, #tpu.memory_space<vmem>>, vector<16x128xf32>
    %cst = arith.constant 5.000000e-01 : f32
    %6 = vector.broadcast %cst : f32 to vector<16x128xf32>
    %7 = arith.mulf %6, %4 : vector<16x128xf32>
    %8 = math.exp %7 : vector<16x128xf32>
    %9 = arith.mulf %8, %8 : vector<16x128xf32>
    %10 = arith.mulf %8, %5 : vector<16x128xf32>
    %11 = arith.addf %3, %10 : vector<16x128xf32>
    %c0_6 = arith.constant 0 : index
    %c0_7 = arith.constant 0 : index
    %12 = vector.load %arg5[%c0_6, %c0_7] : memref<16x128xf32, #tpu.memory_space<vmem>>, vector<16x128xf32>
    tpu.vector_store %arg5[%c0_6, %c0_7], %11 {strides = array<i32>} : memref<16x128xf32, #tpu.memory_space<vmem>>, vector<16x128xf32>,
    %cst_8 = arith.constant 1.000000e+00 : f32
    %13 = vector.broadcast %cst_8 : f32 to vector<16x128xf32>
    %14 = arith.addf %13, %4 : vector<16x128xf32>
    %15 = arith.mulf %3, %3 : vector<16x128xf32>
    %16 = arith.subf %14, %15 : vector<16x128xf32>
    %17 = arith.subf %16, %9 : vector<16x128xf32>
    %c0_9 = arith.constant 0 : index
    %c0_10 = arith.constant 0 : index
    %18 = vector.load %arg7[%c0_9, %c0_10] : memref<8x128xf32, #tpu.memory_space<vmem>>, vector<8x128xf32>
    %19 = vector.shape_cast %17 : vector<16x128xf32> to vector<2x8x128xf32>
    %cst_11 = arith.constant dense<0.000000e+00> : vector<8x128xf32>
    %20 = vector.multi_reduction <add>, %19, %cst_11 [0] : vector<2x8x128xf32> to vector<8x128xf32>
    %21 = arith.addf %18, %20 : vector<8x128xf32>
    %c0_12 = arith.constant 0 : index
    %c0_13 = arith.constant 0 : index
    %22 = vector.load %arg7[%c0_12, %c0_13] : memref<8x128xf32, #tpu.memory_space<vmem>>, vector<8x128xf32>
    tpu.vector_store %arg7[%c0_12, %c0_13], %21 {strides = array<i32>} : memref<8x128xf32, #tpu.memory_space<vmem>>, vector<8x128xf32>,
    %c0_i32_14 = arith.constant 0 : i32
    %23 = arith.cmpi eq, %arg1, %c0_i32_14 : i32
    %24 = arith.extui %23 : i1 to i32
    %c0_i32_15 = arith.constant 0 : i32
    %25 = arith.cmpi ne, %24, %c0_i32_15 : i32
    scf.if %25 {
      %c0_16 = arith.constant 0 : index
      %c0_17 = arith.constant 0 : index
      %26 = vector.load %arg7[%c0_16, %c0_17] : memref<8x128xf32, #tpu.memory_space<vmem>>, vector<8x128xf32>
      %27 = vector.shape_cast %26 : vector<8x128xf32> to vector<1x8x128xf32>
      %cst_18 = arith.constant dense<0.000000e+00> : vector<1xf32>
      %28 = vector.multi_reduction <add>, %27, %cst_18 [1, 2] : vector<1x8x128xf32> to vector<1xf32>
      %29 = vector.shape_cast %28 : vector<1xf32> to vector<1x1x1xf32>
      %30 = vector.extract %29[0, 0, 0] : f32 from vector<1x1x1xf32>
      %31 = vector.broadcast %30 : f32 to vector<1x8x128xf32>
      %c0_19 = arith.constant 0 : index
      %c0_20 = arith.constant 0 : index
      %c0_21 = arith.constant 0 : index
      %32 = vector.load %arg6[%c0_19, %c0_20, %c0_21] : memref<1x8x128xf32, #tpu.memory_space<vmem>>, vector<1x8x128xf32>
      tpu.vector_store %arg6[%c0_19, %c0_20, %c0_21], %31 {strides = array<i32>} : memref<1x8x128xf32, #tpu.memory_space<vmem>>, vector<1x8x128xf32>,
    } else {
    }
    return
  }
  func.func @transform_0(%arg0: i32, %arg1: i32) -> (i32, i32) {
    %c1_i32 = arith.constant 1 : i32
    %0 = arith.muli %arg0, %c1_i32 : i32
    %1 = arith.addi %0, %arg1 : i32
    %c0_i32 = arith.constant 0 : i32
    %c0_i32_0 = arith.constant 0 : i32
    return %1, %c0_i32 : i32, i32
  }
  func.func @transform_1(%arg0: i32, %arg1: i32) -> (i32, i32) {
    %c1_i32 = arith.constant 1 : i32
    %0 = arith.muli %arg0, %c1_i32 : i32
    %1 = arith.addi %0, %arg1 : i32
    %c0_i32 = arith.constant 0 : i32
    %c0_i32_0 = arith.constant 0 : i32
    return %1, %c0_i32 : i32, i32
  }
  func.func @transform_2(%arg0: i32, %arg1: i32) -> (i32, i32) {
    %c1_i32 = arith.constant 1 : i32
    %0 = arith.muli %arg0, %c1_i32 : i32
    %1 = arith.addi %0, %arg1 : i32
    %c0_i32 = arith.constant 0 : i32
    %c0_i32_0 = arith.constant 0 : i32
    return %1, %c0_i32 : i32, i32
  }
  func.func @transform_3(%arg0: i32, %arg1: i32) -> (i32, i32) {
    %c1_i32 = arith.constant 1 : i32
    %0 = arith.muli %arg0, %c1_i32 : i32
    %1 = arith.addi %0, %arg1 : i32
    %c0_i32 = arith.constant 0 : i32
    %c0_i32_0 = arith.constant 0 : i32
    return %1, %c0_i32 : i32, i32
  }
  func.func @transform_4(%arg0: i32, %arg1: i32) -> (i32, i32, i32) {
    %c0_i32 = arith.constant 0 : i32
    %c0_i32_0 = arith.constant 0 : i32
    %c0_i32_1 = arith.constant 0 : i32
    return %arg0, %c0_i32, %c0_i32_0 : i32, i32, i32
  }
}

</mosaic_0001>

<llo_original>
// kernel: vae_step_pallas.2
$region0: #{vae_step_pallas.2}
  #allocation0 [shape = 'u32[]', space=smem, size = 0x4, offset = 0x4, fixed_abs, tag = 'smem constant byte address 0x4 - core index']
  #allocation1 [shape = 'u32[72,128]{1,0:T(1,128)}', space=vmem, size = 0x9000, scoped, tag = 'internal scratch']
  #allocation2 [shape = 'f32[8,128]{1,0:T(8,128)}', space=vmem, size = 0x1000, scoped, tag = 'scratch operand']
  %s0 = inlined_call_operand.vmem [shape: f32[12,128], index: 0, kind: input, shape index: {}]
  %s1 = inlined_call_operand.vmem [shape: f32[12,128], index: 1, kind: input, shape index: {}]
  %s2 = inlined_call_operand.vmem [shape: f32[1,8,128], index: 2, kind: output, shape index: {}]
  %s3 = sld [smem:[#allocation0]]
  $region49: #{vae_step_pallas.2} parent=0
    _
  %s5 = ssub.s32 1, %s3
  %s6 = scalar_select 0, %s5, %s3
  loop: start=0, step=1, limit=4
  $region2: #{vae_step_pallas.2} parent=0 // loop_pre_header
    _
  $region3: #{vae_step_pallas.2} parent=0 // loop_header
    %s8 = sphi 0, %s12
    %p9 = scmp.ge.s32.totalorder %s8, 4
    %s15 = sphi 0, %s27
    %s16 = sphi 0, %s23
    %s17 = sphi 0, %s15
    %s18 = sphi 0, %s16
    %s19 = sphi 0, %s17
    %s20 = sphi 0, %s18
    %s34 = sphi 0, %s36
    %s37 = sphi 0, %s34
    %s38 = sphi 0, %s37
    %s54 = sphi 0, %s38
    %s64 = sphi 0, %s66
    %s67 = sphi 0, %s64
    %s68 = sphi 0, %s67
    %s84 = sphi 0, %s68
    %s90 = sphi 0, %s92
    %s93 = sphi 0, %s90
    %s94 = sphi 0, %s93
    %s110 = sphi 0, %s94
  $region4: #{vae_step_pallas.2} parent=0 // loop_header_branch
    %11 = sbr.rel (%p9) target = $region8
  $region5: #{vae_step_pallas.2} parent=0 // loop_body
    %s13 = ssub.s32 %s8, 1
    %s14 = ssub.s32 %s8, 2
    %s21 = sadd.s32 1, %s16
    %p22 = scmp.ge.s32.totalorder %s21, 2
    %s23 = scalar_select %p22, 0, %s21
    %s24 = sadd.s32 1, %s15
    %s25 = scalar_select %p22, %s24, %s15
    %p26 = scmp.ge.s32.totalorder %s25, 1
    %s27 = scalar_select %p26, 0, %s25
    %s28 = smul.u32 %s15, 2
    %s29 = sadd.s32 %s28, %s16
    %s30 = smul.u32 %s27, 2
    %s31 = sadd.s32 %s30, %s23
    %s32 = ssub.s32 %s29, %s31
    %p33 = scmp.eq.s32.totalorder %s32, 0
    %s35 = sadd.s32 %s34, 1
    %s36 = scalar_select %p33, %s34, %s35
    %p39 = pneg %p33
    %p40 = scmp.eq.s32.totalorder %s8, 1
    %p41 = por %p39, %p40
    %p42 = scmp.ne.s32.totalorder %s34, %s37
    %p43 = scmp.eq.s32.totalorder %s8, 0
    %p44 = por %p42, %p43
    %p45 = scmp.ne.s32.totalorder %s34, %s37
    %p46 = scmp.eq.s32.totalorder %s13, 1
    %p47 = por %p45, %p46
    %p48 = scmp.ne.s32.totalorder %s37, %s38
    %p49 = scmp.eq.s32.totalorder %s13, 0
    %p50 = por %p48, %p49
    %p51 = scmp.ne.s32.totalorder %s37, %s38
    %p52 = scmp.eq.s32.totalorder %s14, 1
    %p53 = por %p51, %p52
    %p55 = scmp.ne.s32.totalorder %s38, %s54
    %p56 = scmp.eq.s32.totalorder %s14, 0
    %p57 = por %p55, %p56
    %s58 = smul.u32 %s15, 2
    %s59 = sadd.s32 %s58, %s16
    %s60 = smul.u32 %s27, 2
    %s61 = sadd.s32 %s60, %s23
    %s62 = ssub.s32 %s59, %s61
    %p63 = scmp.eq.s32.totalorder %s62, 0
    %s65 = sadd.s32 %s64, 1
    %s66 = scalar_select %p63, %s64, %s65
    %p69 = pneg %p63
    %p70 = scmp.eq.s32.totalorder %s8, 1
    %p71 = por %p69, %p70
    %p72 = scmp.ne.s32.totalorder %s64, %s67
    %p73 = scmp.eq.s32.totalorder %s8, 0
    %p74 = por %p72, %p73
    %p75 = scmp.ne.s32.totalorder %s64, %s67
    %p76 = scmp.eq.s32.totalorder %s13, 1
    %p77 = por %p75, %p76
    %p78 = scmp.ne.s32.totalorder %s67, %s68
    %p79 = scmp.eq.s32.totalorder %s13, 0
    %p80 = por %p78, %p79
    %p81 = scmp.ne.s32.totalorder %s67, %s68
    %p82 = scmp.eq.s32.totalorder %s14, 1
    %p83 = por %p81, %p82
    %p85 = scmp.ne.s32.totalorder %s68, %s84
    %p86 = scmp.eq.s32.totalorder %s14, 0
    %p87 = por %p85, %p86
    %s88 = ssub.s32 %s15, %s27
    %p89 = scmp.eq.s32.totalorder %s88, 0
    %s91 = sadd.s32 %s90, 1
    %s92 = scalar_select %p89, %s90, %s91
    %p95 = pneg %p89
    %p96 = scmp.eq.s32.totalorder %s8, 1
    %p97 = por %p95, %p96
    %p98 = scmp.ne.s32.totalorder %s90, %s93
    %p99 = scmp.eq.s32.totalorder %s8, 0
    %p100 = por %p98, %p99
    %p101 = scmp.ne.s32.totalorder %s90, %s93
    %p102 = scmp.eq.s32.totalorder %s13, 1
    %p103 = por %p101, %p102
    %p104 = scmp.ne.s32.totalorder %s93, %s94
    %p105 = scmp.eq.s32.totalorder %s13, 0
    %p106 = por %p104, %p105
    %p107 = scmp.ne.s32.totalorder %s93, %s94
    %p108 = scmp.eq.s32.totalorder %s14, 1
    %p109 = por %p107, %p108
    %p111 = scmp.ne.s32.totalorder %s94, %s110
    %p112 = scmp.eq.s32.totalorder %s14, 0
    %p113 = por %p111, %p112
    %p114 = scmp.le.s32.totalorder 1, %s8
    %p115 = scmp.lt.s32.totalorder %s8, 3
    %p116 = pnand %p114, %p115
    %p117 = pneg %p116
    // Predicated region
    $region9: #{vae_step_pallas.2} parent=5 // pred_check
      _
    $region10: #{vae_step_pallas.2} parent=5 // pred_check_branch
      %119 = sbr.rel (%p116) target = $region12
    $region11: #{vae_step_pallas.2} parent=5 // pred_region
      %s120 = ssub.s32 %s8, 1
    $region12: #{vae_step_pallas.2} parent=5 // pred_fallthru
      _
    %p121 = scmp.lt.s32.totalorder %s8, 2
    // Predicated region
    $region13: #{vae_step_pallas.2} parent=5 // pred_check
      %p122 = pneg %p121
    $region14: #{vae_step_pallas.2} parent=5 // pred_check_branch
      %124 = sbr.rel (%p122) target = $region16
    $region15: #{vae_step_pallas.2} parent=5 // pred_region
      // Predicated region
      $region17: #{vae_step_pallas.2} parent=15 // pred_check
        %p125 = pneg %p44
      $region18: #{vae_step_pallas.2} parent=15 // pred_check_branch
        %127 = sbr.rel (%p125) target = $region20
      $region19: #{vae_step_pallas.2} parent=15 // pred_region
        %s128 = smul.u32 %s15, 2
        %s129 = sadd.s32 %s128, %s16
        %p130 = scmp.lt.s32.totalorder %s129, 1
        %s131 = scalar_select %p130, %s129, 1
        %s132 = smul.addr %s131, 8
        %s133 = scalar_lea.vmem %s0, %s132
        %s134 = smul.u32 %s15, 2
        %s135 = sadd.s32 %s134, %s16
      $region20: #{vae_step_pallas.2} parent=15 // pred_fallthru
        _
      // Predicated region
      $region21: #{vae_step_pallas.2} parent=15 // pred_check
        %p136 = pneg %p74
      $region22: #{vae_step_pallas.2} parent=15 // pred_check_branch
        %138 = sbr.rel (%p136) target = $region24
      $region23: #{vae_step_pallas.2} parent=15 // pred_region
        %s139 = smul.u32 %s15, 2
        %s140 = sadd.s32 %s139, %s16
        %p141 = scmp.lt.s32.totalorder %s140, 1
        %s142 = scalar_select %p141, %s140, 1
        %s143 = smul.addr %s142, 8
        %s144 = scalar_lea.vmem %s1, %s143
        %s145 = smul.u32 %s15, 2
        %s146 = sadd.s32 %s145, %s16
      $region24: #{vae_step_pallas.2} parent=15 // pred_fallthru
        _
    $region16: #{vae_step_pallas.2} parent=5 // pred_fallthru
      _
    %p147 = scmp.le.s32.totalorder 1, %s8
    %p148 = scmp.lt.s32.totalorder %s8, 3
    %p149 = pnand %p147, %p148
    %p150 = pneg %p149
    // Predicated region
    $region25: #{vae_step_pallas.2} parent=5 // pred_check
      _
    $region26: #{vae_step_pallas.2} parent=5 // pred_check_branch
      %152 = sbr.rel (%p149) target = $region28
    $region27: #{vae_step_pallas.2} parent=5 // pred_region
      %s153 = ssub.s32 %s8, 1
      %s154 = smul.u32 %s17, 2
      %s155 = sadd.s32 %s154, %s18
      %p156 = scmp.lt.s32.totalorder %s155, 1
      %s157 = scalar_select %p156, %s155, 1
      %s158 = smul.addr %s157, 8
      %s159 = scalar_lea.vmem %s0, %s158
      %p160 = pneg %p50
      %p161 = pneg %p47
      %s162 = smul.u32 %s17, 2
      %s163 = sadd.s32 %s162, %s18
      %p164 = scmp.lt.s32.totalorder %s163, 1
      %s165 = scalar_select %p164, %s163, 1
      %s166 = smul.addr %s165, 8
      %s167 = scalar_lea.vmem %s1, %s166
      %p168 = pneg %p80
      %p169 = pneg %p77
      %p170 = pneg %p106
      %p171 = pneg %p103
      %p172 = scmp.lt.s32.totalorder %s17, 0
      %s173 = scalar_select %p172, %s17, 0
      %s174 = smul.addr %s173, 8
      %s175 = scalar_lea.vmem %s2, %s174
      %s176 = smul.u32 %s17, 2
      %s177 = sadd.s32 %s176, %s18
      %p178 = scmp.lt.s32.totalorder %s177, 1
      %s179 = scalar_select %p178, %s177, 1
      %s180 = smul.addr %s179, 8
      %s181 = scalar_lea.vmem %s0, %s180
      %s182 = smul.u32 %s17, 2
      %s183 = sadd.s32 %s182, %s18
      %s184 = smul.u32 %s17, 2
      %s185 = sadd.s32 %s184, %s18
      %p186 = scmp.lt.s32.totalorder %s185, 1
      %s187 = scalar_select %p186, %s185, 1
      %s188 = smul.addr %s187, 8
      %s189 = scalar_lea.vmem %s1, %s188
      %s190 = smul.u32 %s17, 2
      %s191 = sadd.s32 %s190, %s18
      %p192 = scmp.lt.s32.totalorder %s17, 0
      %s193 = scalar_select %p192, %s17, 0
      %s194 = smul.addr %s193, 8
      %s195 = scalar_lea.vmem %s2, %s194
      %p196 = scmp.eq.s32.totalorder %s18, 0
      // Predicated region
      $region29: #{vae_step_pallas.2} parent=27 // pred_check
        %p197 = pneg %p196
      $region30: #{vae_step_pallas.2} parent=27 // pred_check_branch
        %199 = sbr.rel (%p197) target = $region32
      $region31: #{vae_step_pallas.2} parent=27 // pred_region
        %200 = vst [vmem:[#allocation2] sm:$0xff] 0.0
      $region32: #{vae_step_pallas.2} parent=27 // pred_fallthru
        _
      %v201 = vld [vmem:[%s181] sm:$0xff]
      %v202 = vld [vmem:[%s189] sm:$0xff]
      %v203 = vsub.f32 %v201, %v202
      %v204 = vmul.f32 %v203, %v203
      %s205 = smul.u32 %s17, 2
      %s206 = sadd.s32 %s205, %s18
      %s207 = smul.u32 %s206, 8
      %v208 = vlaneseq
      %v209 = vshrl.u32 %v208, 7
      %v210 = vstv %s207
      %v211 = vadd.s32 %v210, %v209
      %vm212 = vcmp.lt.s32.totalorder %v211, 12
      %v213 = vsel %vm212, %v204, 0.0
      %v214 = vld [vmem:[#allocation2] sm:$0xff]
      %v215 = vadd.f32 %v213, 0.0
      %v216 = vadd.f32 %v214, %v215
      %217 = vst [vmem:[#allocation2] sm:$0xff] %v216
      %p218 = scmp.eq.s32.totalorder %s18, 1
      // Predicated region
      $region33: #{vae_step_pallas.2} parent=27 // pred_check
        %p219 = pneg %p218
      $region34: #{vae_step_pallas.2} parent=27 // pred_check_branch
        %221 = sbr.rel (%p219) target = $region36
      $region35: #{vae_step_pallas.2} parent=27 // pred_region
        %v222 = vld [vmem:[#allocation2] sm:$0xff]
        %223 = vadd.xlane.f32.xlu0 %v222
        %v224 = vpop.xlane.xlu0 %223
        %v225 = vrot.slane %v224, 4
        %v226 = vadd.f32 %v224, %v225
        %v227 = vrot.slane %v226, 2
        %v228 = vadd.f32 %v226, %v227
        %v229 = vrot.slane %v228, 1
        %v230 = vadd.f32 %v228, %v229
        %s231 = vtos %v230
        %v232 = vstv %s231
        %233 = vst [vmem:[%s195] sm:$0xff] %v232
      $region36: #{vae_step_pallas.2} parent=27 // pred_fallthru
        _
      %p234 = scmp.lt.s32.totalorder %s17, 0
      %s235 = scalar_select %p234, %s17, 0
      %s236 = smul.addr %s235, 8
      %s237 = scalar_lea.vmem %s2, %s236
      // Predicated region
      $region37: #{vae_step_pallas.2} parent=27 // pred_check
        %p238 = pneg %p103
      $region38: #{vae_step_pallas.2} parent=27 // pred_check_branch
        %240 = sbr.rel (%p238) target = $region40
      $region39: #{vae_step_pallas.2} parent=27 // pred_region
        _
      $region40: #{vae_step_pallas.2} parent=27 // pred_fallthru
        _
      // Predicated region
      $region41: #{vae_step_pallas.2} parent=27 // pred_check
        %p241 = pneg %p103
      $region42: #{vae_step_pallas.2} parent=27 // pred_check_branch
        %243 = sbr.rel (%p241) target = $region44
      $region43: #{vae_step_pallas.2} parent=27 // pred_region
        %p244 = scmp.lt.s32.totalorder %s17, 0
        %s245 = scalar_select %p244, %s17, 0
        %s246 = smul.addr %s245, 8
        %s247 = scalar_lea.vmem %s2, %s246
      $region44: #{vae_step_pallas.2} parent=27 // pred_fallthru
        _
    $region28: #{vae_step_pallas.2} parent=5 // pred_fallthru
      _
    %p248 = scmp.le.s32.totalorder 2, %s8
    // Predicated region
    $region45: #{vae_step_pallas.2} parent=5 // pred_check
      %p249 = pneg %p248
    $region46: #{vae_step_pallas.2} parent=5 // pred_check_branch
      %251 = sbr.rel (%p249) target = $region48
    $region47: #{vae_step_pallas.2} parent=5 // pred_region
      %s252 = ssub.s32 %s8, 2
    $region48: #{vae_step_pallas.2} parent=5 // pred_fallthru
      _
  $region6: #{vae_step_pallas.2} parent=0 // loop_footer
    %s12 = sadd.s32 1, %s8
  $region7: #{vae_step_pallas.2} parent=0 // loop_footer_branch
    %7 = sbr.rel target = $region3
  $region8: #{vae_step_pallas.2} parent=0 // loop_exit
    _

// kernel: vae_step_pallas.3
$region0: #{vae_step_pallas.3}
  #allocation0 [shape = 'u32[]', space=smem, size = 0x4, offset = 0x4, fixed_abs, tag = 'smem constant byte address 0x4 - core index']
  #allocation1 [shape = 'u32[72,128]{1,0:T(1,128)}', space=vmem, size = 0x9000, scoped, tag = 'internal scratch']
  #allocation2 [shape = 'f32[8,128]{1,0:T(8,128)}', space=vmem, size = 0x1000, scoped, tag = 'scratch operand']
  %s0 = inlined_call_operand.vmem [shape: f32[16,128], index: 0, kind: input, shape index: {}]
  %s1 = inlined_call_operand.vmem [shape: f32[16,128], index: 1, kind: input, shape index: {}]
  %s2 = inlined_call_operand.vmem [shape: f32[16,128], index: 2, kind: input, shape index: {}]
  %s3 = inlined_call_operand.vmem [shape: f32[16,128], index: 3, kind: output, shape index: {0}]
  %s4 = inlined_call_operand.vmem [shape: f32[1,8,128], index: 4, kind: output, shape index: {1}]
  %5 = xla_tuple %s3, %s4
  %s6 = sld [smem:[#allocation0]]
  $region38: #{vae_step_pallas.3} parent=0
    _
  %s8 = ssub.s32 1, %s6
  %s9 = scalar_select 0, %s8, %s6
  // Predicated region
  $region2: #{vae_step_pallas.3} parent=0 // pred_check
    _
  $region3: #{vae_step_pallas.3} parent=0 // pred_check_branch
    %11 = sbr.rel (0) target = $region5
  $region4: #{vae_step_pallas.3} parent=0 // pred_region
    %s12 = sadd.s32 0, 0
    %s13 = smul.u32 2, %s12
    %p14 = scmp.lt.s32.totalorder %s13, 1
    %s15 = scalar_select %p14, %s13, 1
    %s16 = smul.addr %s15, 8
    %s17 = scalar_lea.vmem %s0, %s16
    %s18 = sadd.s32 0, 0
    %s19 = smul.u32 2, %s18
  $region5: #{vae_step_pallas.3} parent=0 // pred_fallthru
    _
  // Predicated region
  $region6: #{vae_step_pallas.3} parent=0 // pred_check
    _
  $region7: #{vae_step_pallas.3} parent=0 // pred_check_branch
    %21 = sbr.rel (0) target = $region9
  $region8: #{vae_step_pallas.3} parent=0 // pred_region
    %s22 = sadd.s32 0, 0
    %s23 = smul.u32 2, %s22
    %p24 = scmp.lt.s32.totalorder %s23, 1
    %s25 = scalar_select %p24, %s23, 1
    %s26 = smul.addr %s25, 8
    %s27 = scalar_lea.vmem %s1, %s26
    %s28 = sadd.s32 0, 0
    %s29 = smul.u32 2, %s28
  $region9: #{vae_step_pallas.3} parent=0 // pred_fallthru
    _
  // Predicated region
  $region10: #{vae_step_pallas.3} parent=0 // pred_check
    _
  $region11: #{vae_step_pallas.3} parent=0 // pred_check_branch
    %31 = sbr.rel (0) target = $region13
  $region12: #{vae_step_pallas.3} parent=0 // pred_region
    %s32 = sadd.s32 0, 0
    %s33 = smul.u32 2, %s32
    %p34 = scmp.lt.s32.totalorder %s33, 1
    %s35 = scalar_select %p34, %s33, 1
    %s36 = smul.addr %s35, 8
    %s37 = scalar_lea.vmem %s2, %s36
    %s38 = sadd.s32 0, 0
    %s39 = smul.u32 2, %s38
  $region13: #{vae_step_pallas.3} parent=0 // pred_fallthru
    _
  %s40 = sadd.s32 0, 0
  %s41 = smul.u32 2, %s40
  %p42 = scmp.lt.s32.totalorder %s41, 1
  %s43 = scalar_select %p42, %s41, 1
  %s44 = smul.addr %s43, 8
  %s45 = scalar_lea.vmem %s0, %s44
  %s46 = sadd.s32 0, 0
  %s47 = smul.u32 2, %s46
  %p48 = scmp.lt.s32.totalorder %s47, 1
  %s49 = scalar_select %p48, %s47, 1
  %s50 = smul.addr %s49, 8
  %s51 = scalar_lea.vmem %s1, %s50
  %s52 = sadd.s32 0, 0
  %s53 = smul.u32 2, %s52
  %p54 = scmp.lt.s32.totalorder %s53, 1
  %s55 = scalar_select %p54, %s53, 1
  %s56 = smul.addr %s55, 8
  %s57 = scalar_lea.vmem %s2, %s56
  %s58 = sadd.s32 0, 0
  %s59 = smul.u32 2, %s58
  %p60 = scmp.lt.s32.totalorder %s59, 1
  %s61 = scalar_select %p60, %s59, 1
  %s62 = smul.addr %s61, 8
  %s63 = scalar_lea.vmem %s3, %s62
  %s64 = sadd.s32 0, 0
  %s65 = smul.u32 2, %s64
  %p66 = scmp.lt.s32.totalorder %s65, 1
  %s67 = scalar_select %p66, %s65, 1
  %s68 = smul.addr %s67, 8
  %s69 = scalar_lea.vmem %s0, %s68
  %s70 = sadd.s32 0, 0
  %s71 = smul.u32 2, %s70
  %s72 = sadd.s32 0, 0
  %s73 = smul.u32 2, %s72
  %p74 = scmp.lt.s32.totalorder %s73, 1
  %s75 = scalar_select %p74, %s73, 1
  %s76 = smul.addr %s75, 8
  %s77 = scalar_lea.vmem %s1, %s76
  %s78 = sadd.s32 0, 0
  %s79 = smul.u32 2, %s78
  %s80 = sadd.s32 0, 0
  %s81 = smul.u32 2, %s80
  %p82 = scmp.lt.s32.totalorder %s81, 1
  %s83 = scalar_select %p82, %s81, 1
  %s84 = smul.addr %s83, 8
  %s85 = scalar_lea.vmem %s2, %s84
  %s86 = sadd.s32 0, 0
  %s87 = smul.u32 2, %s86
  %s88 = sadd.s32 0, 0
  %s89 = smul.u32 2, %s88
  %p90 = scmp.lt.s32.totalorder %s89, 1
  %s91 = scalar_select %p90, %s89, 1
  %s92 = smul.addr %s91, 8
  %s93 = scalar_lea.vmem %s3, %s92
  %s94 = sadd.s32 0, 0
  %s95 = smul.u32 2, %s94
  %p96 = scmp.eq.s32.totalorder 0, 0
  // Predicated region
  $region14: #{vae_step_pallas.3} parent=0 // pred_check
    %p97 = pneg %p96
  $region15: #{vae_step_pallas.3} parent=0 // pred_check_branch
    %99 = sbr.rel (%p97) target = $region17
  $region16: #{vae_step_pallas.3} parent=0 // pred_region
    %100 = vst [vmem:[#allocation2] sm:$0xff] 0.0
  $region17: #{vae_step_pallas.3} parent=0 // pred_fallthru
    _
  %v101 = vld [vmem:[%s69] sm:$0xff]
  %v102 = vld [vmem:[%s69 + $0x8] sm:$0xff]
  %v103 = vld [vmem:[%s77] sm:$0xff]
  %v104 = vld [vmem:[%s77 + $0x8] sm:$0xff]
  %v105 = vld [vmem:[%s85] sm:$0xff]
  %v106 = vld [vmem:[%s85 + $0x8] sm:$0xff]
  %v107 = vmul.f32 %v103, 0.5
  %v108 = vmul.f32 %v104, 0.5
  %v109 = vmul.f32 %v107, 1.442695
  %v110 = vpow.pop %v109
  %v111 = vmul.f32 %v108, 1.442695
  %v112 = vpow.pop %v111
  %v113 = vmul.f32 %v110, %v110
  %v114 = vmul.f32 %v112, %v112
  %v115 = vmul.f32 %v110, %v105
  %v116 = vmul.f32 %v112, %v106
  %v117 = vadd.f32 %v101, %v115
  %v118 = vadd.f32 %v102, %v116
  %119 = vst [vmem:[%s93] sm:$0xff] %v117
  %120 = vst [vmem:[%s93 + $0x8] sm:$0xff] %v118
  %v121 = vadd.f32 %v103, 1.0
  %v122 = vadd.f32 %v104, 1.0
  %v123 = vmul.f32 %v101, %v101
  %v124 = vmul.f32 %v102, %v102
  %v125 = vsub.f32 %v121, %v123
  %v126 = vsub.f32 %v122, %v124
  %v127 = vsub.f32 %v125, %v113
  %v128 = vsub.f32 %v126, %v114
  %v129 = vld [vmem:[#allocation2] sm:$0xff]
  %v130 = vadd.f32 %v127, %v128
  %v131 = vadd.f32 %v129, %v130
  %132 = vst [vmem:[#allocation2] sm:$0xff] %v131
  // Predicated region
  $region18: #{vae_step_pallas.3} parent=0 // pred_check
    %p133 = pneg %p96
  $region19: #{vae_step_pallas.3} parent=0 // pred_check_branch
    %135 = sbr.rel (%p133) target = $region21
  $region20: #{vae_step_pallas.3} parent=0 // pred_region
    %v136 = vld [vmem:[#allocation2] sm:$0xff]
    %137 = vadd.xlane.f32.xlu0 %v136
    %v138 = vpop.xlane.xlu0 %137
    %v139 = vrot.slane %v138, 4
    %v140 = vadd.f32 %v138, %v139
    %v141 = vrot.slane %v140, 2
    %v142 = vadd.f32 %v140, %v141
    %v143 = vrot.slane %v142, 1
    %v144 = vadd.f32 %v142, %v143
    %s145 = vtos %v144
    %v146 = vstv %s145
    %147 = vst [vmem:[%s4] sm:$0xff] %v146
  $region21: #{vae_step_pallas.3} parent=0 // pred_fallthru
    _
  %s148 = sadd.s32 0, 0
  %s149 = smul.u32 2, %s148
  %p150 = scmp.lt.s32.totalorder %s149, 1
  %s151 = scalar_select %p150, %s149, 1
  %s152 = smul.addr %s151, 8
  %s153 = scalar_lea.vmem %s3, %s152
  // Predicated region
  $region22: #{vae_step_pallas.3} parent=0 // pred_check
    _
  $region23: #{vae_step_pallas.3} parent=0 // pred_check_branch
    %155 = sbr.rel (0) target = $region25
  $region24: #{vae_step_pallas.3} parent=0 // pred_region
    %s156 = sadd.s32 0, 0
    %s157 = smul.u32 2, %s156
  $region25: #{vae_step_pallas.3} parent=0 // pred_fallthru
    _
  // Predicated region
  $region26: #{vae_step_pallas.3} parent=0 // pred_check
    _
  $region27: #{vae_step_pallas.3} parent=0 // pred_check_branch
    %159 = sbr.rel (0) target = $region29
  $region28: #{vae_step_pallas.3} parent=0 // pred_region
    _
  $region29: #{vae_step_pallas.3} parent=0 // pred_fallthru
    _
  // Predicated region
  $region30: #{vae_step_pallas.3} parent=0 // pred_check
    _
  $region31: #{vae_step_pallas.3} parent=0 // pred_check_branch
    %161 = sbr.rel (0) target = $region33
  $region32: #{vae_step_pallas.3} parent=0 // pred_region
    %s162 = sadd.s32 0, 0
    %s163 = smul.u32 2, %s162
    %p164 = scmp.lt.s32.totalorder %s163, 1
    %s165 = scalar_select %p164, %s163, 1
    %s166 = smul.addr %s165, 8
    %s167 = scalar_lea.vmem %s3, %s166
  $region33: #{vae_step_pallas.3} parent=0 // pred_fallthru
    _
  // Predicated region
  $region34: #{vae_step_pallas.3} parent=0 // pred_check
    _
  $region35: #{vae_step_pallas.3} parent=0 // pred_check_branch
    %169 = sbr.rel (0) target = $region37
  $region36: #{vae_step_pallas.3} parent=0 // pred_region
    _
  $region37: #{vae_step_pallas.3} parent=0 // pred_fallthru
    _

</llo_original>
